<compile_context>
chip_gen: v7x
topology: tpu7x:2x2x1
jax: 0.10.0
libtpu: 0.0.40
codegen_flags: <defaults>
</compile_context>

<pallas_src>
import functools

import jax
import jax.numpy as jnp
from jax.experimental import pallas as pl
from jax.experimental.pallas import tpu as pltpu

_SQRT_HALF = 0.7071067811865476
_MIB = 1024 * 1024


def _lm_layer_kernel(x_ref, we_ref, be_ref, lnw_ref, lnb_ref, wh_ref,
                     out_ref, h_ref):
    # x_ref:   (tm, E)   row tile of flattened input (compute dtype)
    # we_ref:  (E, E)    embed weight, pre-transposed (y = x @ we + be)
    # be_ref:  (1, E)    embed bias (f32)
    # lnw_ref: (1, E)    layernorm gamma (f32)
    # lnb_ref: (1, E)    layernorm beta (f32)
    # wh_ref:  (E, tn)   vocab tile of head weight, pre-transposed (no bias)
    # out_ref: (tm, tn)  output logits tile
    # h_ref:   (tm, E)   scratch: LayerNorm output, reused across the j sweep
    j = pl.program_id(1)

    @pl.when(j == 0)
    def _():
        # embed: Linear(E, E); MXU eats the stored (bf16) operands, f32 acc.
        h = jnp.dot(x_ref[...], we_ref[...],
                    preferred_element_type=jnp.float32)
        h = h + be_ref[...]
        # Exact (erf) GELU, matching F.gelu's default formulation.
        h = 0.5 * h * (1.0 + jax.lax.erf(h * jnp.float32(_SQRT_HALF)))
        # LayerNorm over the last dim, eps = 1e-5 (PyTorch default).
        # var = E[h^2] - mean^2 fuses the two XLU reduction passes.
        mean = jnp.mean(h, axis=-1, keepdims=True)
        msq = jnp.mean(h * h, axis=-1, keepdims=True)
        var = jnp.maximum(msq - mean * mean, 0.0)
        h = (h - mean) * jax.lax.rsqrt(var + jnp.float32(1e-5))
        h = h * lnw_ref[...] + lnb_ref[...]
        h_ref[...] = h.astype(h_ref.dtype)

    # head: Linear(E, V, bias=False) on the current vocab tile.
    out_ref[...] = jnp.dot(h_ref[...], wh_ref[...],
                           preferred_element_type=jnp.float32
                           ).astype(out_ref.dtype)


def _round_up(x, m):
    return ((x + m - 1) // m) * m


def _tpu_vmem_capacity_bytes():
    try:
        return int(pltpu.get_tpu_info().vmem_capacity_bytes)
    except Exception:
        return 128 * _MIB  # v5e/v6e default


def _vmem_bytes_estimate(tm, tn, E, c_item, o_item, single_buffer_invariants):
    inv = 1 if single_buffer_invariants else 2
    Ep = _round_up(E, 128)
    x_tile = 2 * tm * E * c_item                 # double-buffered input rows
    we = inv * E * E * c_item                    # grid-invariant embed weight
    vecs = inv * 3 * 8 * Ep * 4                  # bias / gamma / beta (f32)
    wh_tile = 2 * E * tn * c_item                # streamed head-weight tile
    o_tile = 2 * tm * tn * o_item                # double-buffered output tile
    h_scr = tm * E * c_item                      # h scratch
    return x_tile + we + vecs + wh_tile + o_tile + h_scr


def _choose_tile(total, align, target, prefer_min):
    """Pick a tile (multiple of `align`) and the padded total.

    Prefers the largest divisor of round_up(total, align) that is <= target
    (avoids padding and the post-call slice copy); falls back to `target` with
    padding when only tiny divisors exist.
    """
    padded_min = _round_up(total, align)
    target = min(max(align, _round_up(target, align)), padded_min)
    best = align
    d = align
    while d <= target:
        if padded_min % d == 0:
            best = d
        d += align
    if best >= min(prefer_min, padded_min):
        return best, padded_min
    return target, _round_up(total, target)


@functools.partial(
    jax.jit,
    static_argnames=("tm", "tn", "compute_dtype", "out_dtype",
                     "single_buffer_invariants"))
def lm_layer_pallas(x2d, we_t, be, lnw, lnb, wh_t, *, tm=None, tn=None,
                    compute_dtype=jnp.bfloat16, out_dtype=None,
                    single_buffer_invariants=True):
    """x2d: (M, E) flattened input rows; returns (M, V) logits."""
    M, E = x2d.shape
    V = wh_t.shape[1]
    cdt = jnp.dtype(compute_dtype) if compute_dtype is not None else jnp.dtype(x2d.dtype)
    odt = jnp.dtype(out_dtype) if out_dtype is not None else jnp.dtype(x2d.dtype)

    vmem_cap = _tpu_vmem_capacity_bytes()
    small_vmem = vmem_cap <= 96 * _MIB           # v7x-class part (64 MiB / TC)
    vmem_budget = max(vmem_cap - 8 * _MIB, 16 * _MIB)

    tm_user, tn_user = tm, tn

    # Generation-aware targets (sized for bf16; halved for f32 operands).
    tm_target = 512 if small_vmem else 1024
    tn_target = 512 if small_vmem else 1024
    if cdt.itemsize >= 4:
        tm_target //= 2
        tn_target //= 2
    if tm_user is not None:
        tm_target = max(8, _round_up(tm_user, 8))
    if tn_user is not None:
        tn_target = max(128, _round_up(tn_user, 128))

    # Shrink the auto-chosen targets until the tile plan fits physical VMEM.
    while (_vmem_bytes_estimate(min(tm_target, _round_up(M, 8)),
                                min(tn_target, _round_up(V, 128)),
                                E, cdt.itemsize, odt.itemsize,
                                single_buffer_invariants)
           > 0.75 * vmem_budget):
        if tn_user is None and tn_target > 256:
            tn_target //= 2
        elif tm_user is None and tm_target > 128:
            tm_target //= 2
        else:
            break

    # Row tiling.
    if tm_user is not None:
        tm_v = min(tm_target, _round_up(M, 8))
        Mp = _round_up(M, tm_v)
    else:
        tm_v, Mp = _choose_tile(M, 8, tm_target, prefer_min=max(8, tm_target // 2))
        # v7x megacore: make sure the "parallel" i axis has >= 2 row tiles.
        if small_vmem and Mp == tm_v and Mp >= 16:
            tm_v = _round_up((Mp + 1) // 2, 8)
            Mp = _round_up(M, tm_v)

    # Vocab tiling: prefer a divisor of round_up(V, 128) to avoid V padding
    # (and the post-call full-logits slice copy when V is 128-aligned).
    if tn_user is not None:
        tn_v = min(tn_target, _round_up(V, 128))
        Vp = _round_up(V, tn_v)
    else:
        prefer_v = 128 if V % 128 == 0 else 256
        tn_v, Vp = _choose_tile(V, 128, tn_target, prefer_min=prefer_v)

    # Cast matmul operands to the compute dtype (bf16 feeds the MXU natively);
    # f32 accumulation happens inside the kernel.
    x2d = x2d.astype(cdt)
    we_t = we_t.astype(cdt)
    wh_t = wh_t.astype(cdt)
    if Mp != M:
        x2d = jnp.pad(x2d, ((0, Mp - M), (0, 0)))
    if Vp != V:
        wh_t = jnp.pad(wh_t, ((0, 0), (0, Vp - V)))

    be2 = be.reshape(1, E).astype(jnp.float32)
    lnw2 = lnw.reshape(1, E).astype(jnp.float32)
    lnb2 = lnb.reshape(1, E).astype(jnp.float32)

    est = _vmem_bytes_estimate(tm_v, tn_v, E, cdt.itemsize, odt.itemsize,
                               single_buffer_invariants)
    vmem_limit = int(min(vmem_budget, max(24 * _MIB, int(1.25 * est))))

    if single_buffer_invariants:
        def inv_spec(shape):
            return pl.BlockSpec(shape, lambda i, j: (0, 0),
                                pipeline_mode=pl.Buffered(1))
    else:
        def inv_spec(shape):
            return pl.BlockSpec(shape, lambda i, j: (0, 0))

    grid = (Mp // tm_v, Vp // tn_v)
    out = pl.pallas_call(
        _lm_layer_kernel,
        out_shape=jax.ShapeDtypeStruct((Mp, Vp), odt),
        grid_spec=pltpu.PrefetchScalarGridSpec(
            num_scalar_prefetch=0,
            grid=grid,
            in_specs=[
                pl.BlockSpec((tm_v, E), lambda i, j: (i, 0)),   # x row tile
                inv_spec((E, E)),                               # embed W^T (grid-invariant)
                inv_spec((1, E)),                               # embed bias
                inv_spec((1, E)),                               # ln gamma
                inv_spec((1, E)),                               # ln beta
                pl.BlockSpec((E, tn_v), lambda i, j: (0, j)),   # head W^T vocab tile
            ],
            out_specs=pl.BlockSpec((tm_v, tn_v), lambda i, j: (i, j)),
            scratch_shapes=[pltpu.VMEM((tm_v, E), cdt)],        # h, reused over j
        ),
        compiler_params=pltpu.CompilerParams(
            dimension_semantics=("parallel", "arbitrary"),
            vmem_limit_bytes=vmem_limit),
    )(x2d, we_t, be2, lnw2, lnb2, wh_t)

    if (Mp, Vp) != (M, V):
        out = out[:M, :V]
    return out


_SINGLE_BUFFER_OK = None  # memoized: does this Pallas accept pl.Buffered(1)?


def lm_layer_forward(x, params, *, tm=None, tn=None,
                     compute_dtype=jnp.bfloat16, out_dtype=None):
    """x: (batch, seq, n_embd) -> (batch, seq, n_vocab)."""
    global _SINGLE_BUFFER_OK
    B, S, E = x.shape
    we_t, be, lnw, lnb, wh_t = params
    V = wh_t.shape[1]
    x2d = x.reshape(B * S, E)

    def call(single_buffer):
        return lm_layer_pallas(x2d, we_t, be, lnw, lnb, wh_t, tm=tm, tn=tn,
                               compute_dtype=compute_dtype, out_dtype=out_dtype,
                               single_buffer_invariants=single_buffer)

    if _SINGLE_BUFFER_OK is None:
        try:
            out2d = jax.block_until_ready(call(True))
            _SINGLE_BUFFER_OK = True
        except Exception:
            # Single-buffering the grid-invariant operands is a pure VMEM
            # optimization; fall back to default double buffering if rejected.
            _SINGLE_BUFFER_OK = False
            out2d = call(False)
    else:
        out2d = call(_SINGLE_BUFFER_OK)
    return out2d.reshape(B, S, V)


def _reference(x, params):
    we_t, be, lnw, lnb, wh_t = params
    h = x @ we_t + be
    h = jax.nn.gelu(h, approximate=False)
    mean = jnp.mean(h, axis=-1, keepdims=True)
    var = jnp.mean((h - mean) ** 2, axis=-1, keepdims=True)
    h = (h - mean) * jax.lax.rsqrt(var + 1e-5)
    h = h * lnw + lnb
    return h @ wh_t


def _make_params(key, n_embd, n_vocab):
    k1, k2, k3 = jax.random.split(key, 3)
    bound = 1.0 / jnp.sqrt(jnp.float32(n_embd))
    embed_w = jax.random.uniform(k1, (n_embd, n_embd), jnp.float32, -bound, bound)
    embed_b = jax.random.uniform(k2, (n_embd,), jnp.float32, -bound, bound)
    ln_w = jnp.ones((n_embd,), jnp.float32)
    ln_b = jnp.zeros((n_embd,), jnp.float32)
    head_w = jax.random.uniform(k3, (n_vocab, n_embd), jnp.float32, -bound, bound)
    # Pre-transpose weights for x @ W form (glue, not kernel work).
    return (embed_w.T, embed_b, ln_w, ln_b, head_w.T)


if __name__ == "__main__":
    key = jax.random.PRNGKey(0)
    kx1, kp1, kx2, kp2, kx3, kp3 = jax.random.split(key, 6)

    # Test 1: exact-precision path (f32 operands), single-tile grid; vocab
    # padded 64 -> 128 for a lane-dense output tile.
    b1, s1, e1, v1 = 2, 8, 32, 64
    x1 = jax.random.normal(kx1, (b1, s1, e1), jnp.float32)
    p1 = _make_params(kp1, e1, v1)
    o1 = jax.block_until_ready(
        lm_layer_forward(x1, p1, compute_dtype=jnp.float32))
    r1 = _reference(x1, p1)
    assert o1.shape == (b1, s1, v1)
    assert o1.dtype == x1.dtype
    assert jnp.allclose(o1, r1, atol=2e-4, rtol=2e-4), (
        float(jnp.max(jnp.abs(o1 - r1))))

    # Test 2: multi-tile grid + row padding + h-scratch reuse across the vocab
    # sweep (explicit tm/tn -> grid (2, 3), M padded 24 -> 32).
    b2, s2, e2, v2 = 2, 12, 128, 384
    x2 = jax.random.normal(kx2, (b2, s2, e2), jnp.float32)
    p2 = _make_params(kp2, e2, v2)
    o2 = jax.block_until_ready(
        lm_layer_forward(x2, p2, tm=16, tn=128, compute_dtype=jnp.float32))
    r2 = _reference(x2, p2)
    assert o2.shape == (b2, s2, v2)
    assert jnp.allclose(o2, r2, atol=2e-4, rtol=2e-4), (
        float(jnp.max(jnp.abs(o2 - r2))))

    # Test 3: default performance path — bf16 matmul operands (f32 accumulation)
    # and bf16 logits, auto tiling (tn picked as a divisor of V -> no V pad).
    b3, s3, e3, v3 = 2, 16, 128, 384
    x3 = jax.random.normal(kx3, (b3, s3, e3), jnp.float32)
    p3 = _make_params(kp3, e3, v3)
    o3 = jax.block_until_ready(
        lm_layer_forward(x3, p3, out_dtype=jnp.bfloat16))
    we3, be3, lnw3, lnb3, wh3 = p3
    r3 = _reference(
        x3.astype(jnp.bfloat16).astype(jnp.float32),
        (we3.astype(jnp.bfloat16).astype(jnp.float32), be3, lnw3, lnb3,
         wh3.astype(jnp.bfloat16).astype(jnp.float32)))
    assert o3.shape == (b3, s3, v3)
    assert o3.dtype == jnp.bfloat16
    assert jnp.allclose(o3.astype(jnp.float32), r3, atol=6e-2, rtol=6e-2), (
        float(jnp.max(jnp.abs(o3.astype(jnp.float32) - r3))))

    print("KERNEL_OK")
</pallas_src>

<mosaic_0001>
module attributes {stable_mosaic.version = 11 : i64} {
  func.func @_lm_layer_kernel(%arg0: i32, %arg1: i32, %arg2: memref<16x32xf32, #tpu.memory_space<vmem>>, %arg3: memref<32x32xf32, #tpu.memory_space<vmem>>, %arg4: memref<1x32xf32, #tpu.memory_space<vmem>>, %arg5: memref<1x32xf32, #tpu.memory_space<vmem>>, %arg6: memref<1x32xf32, #tpu.memory_space<vmem>>, %arg7: memref<32x128xf32, #tpu.memory_space<vmem>>, %arg8: memref<16x128xf32, #tpu.memory_space<vmem>>, %arg9: memref<16x32xf32, #tpu.memory_space<vmem>>) attributes {dimension_semantics = [#tpu.dimension_semantics<parallel>, #tpu.dimension_semantics<arbitrary>], iteration_bounds = array<i64: 1, 1>, scalar_prefetch = 0 : i64, scratch_operands = 1 : i64, tpu.core_type = #tpu.core_type<tc>, window_params = [{transform_indices = @transform_0, window_bounds = array<i64: 16, 32>}, {pipeline_mode = #tpu.pipeline_mode<synchronous>, transform_indices = @transform_1, window_bounds = array<i64: 32, 32>}, {pipeline_mode = #tpu.pipeline_mode<synchronous>, transform_indices = @transform_2, window_bounds = array<i64: 1, 32>}, {pipeline_mode = #tpu.pipeline_mode<synchronous>, transform_indices = @transform_3, window_bounds = array<i64: 1, 32>}, {pipeline_mode = #tpu.pipeline_mode<synchronous>, transform_indices = @transform_4, window_bounds = array<i64: 1, 32>}, {transform_indices = @transform_5, window_bounds = array<i64: 32, 128>}, {transform_indices = @transform_6, window_bounds = array<i64: 16, 128>}]} {
    %c0_i32 = arith.constant 0 : i32
    %0 = arith.cmpi eq, %arg1, %c0_i32 : i32
    %1 = arith.extui %0 : i1 to i32
    %c0_i32_0 = arith.constant 0 : i32
    %2 = arith.cmpi ne, %1, %c0_i32_0 : i32
    scf.if %2 {
      %c0_6 = arith.constant 0 : index
      %c0_7 = arith.constant 0 : index
      %7 = vector.load %arg2[%c0_6, %c0_7] : memref<16x32xf32, #tpu.memory_space<vmem>>, vector<16x32xf32>
      %c0_8 = arith.constant 0 : index
      %c0_9 = arith.constant 0 : index
      %8 = vector.load %arg3[%c0_8, %c0_9] : memref<32x32xf32, #tpu.memory_space<vmem>>, vector<32x32xf32>
      %cst_10 = arith.constant dense<0.000000e+00> : vector<16x32xf32>
      %9 = tpu.matmul %7, %8, %cst_10 {dimension_numbers = #tpu.dot_dimension_numbers<[1], [0], [0], [1], [0, 0, 1, 1], [], []>} : vector<16x32xf32>, vector<32x32xf32>, vector<16x32xf32> -> vector<16x32xf32>
      %c0_11 = arith.constant 0 : index
      %c0_12 = arith.constant 0 : index
      %10 = vector.load %arg4[%c0_11, %c0_12] : memref<1x32xf32, #tpu.memory_space<vmem>>, vector<1x32xf32>
      %11 = vector.broadcast %10 : vector<1x32xf32> to vector<16x32xf32>
      %12 = arith.addf %9, %11 : vector<16x32xf32>
      %cst_13 = arith.constant 5.000000e-01 : f32
      %13 = vector.broadcast %cst_13 : f32 to vector<16x32xf32>
      %14 = arith.mulf %13, %12 : vector<16x32xf32>
      %cst_14 = arith.constant 0.707106769 : f32
      %15 = vector.broadcast %cst_14 : f32 to vector<16x32xf32>
      %16 = arith.mulf %12, %15 : vector<16x32xf32>
      %17 = math.erf %16 : vector<16x32xf32>
      %cst_15 = arith.constant 1.000000e+00 : f32
      %18 = vector.broadcast %cst_15 : f32 to vector<16x32xf32>
      %19 = arith.addf %18, %17 : vector<16x32xf32>
      %20 = arith.mulf %14, %19 : vector<16x32xf32>
      %cst_16 = arith.constant dense<0.000000e+00> : vector<16xf32>
      %21 = vector.multi_reduction <add>, %20, %cst_16 [1] : vector<16x32xf32> to vector<16xf32>
      %22 = vector.shape_cast %21 : vector<16xf32> to vector<16x1xf32>
      %cst_17 = arith.constant 3.200000e+01 : f32
      %23 = vector.broadcast %cst_17 : f32 to vector<16x1xf32>
      %24 = arith.divf %22, %23 : vector<16x1xf32>
      %25 = arith.mulf %20, %20 : vector<16x32xf32>
      %cst_18 = arith.constant dense<0.000000e+00> : vector<16xf32>
      %26 = vector.multi_reduction <add>, %25, %cst_18 [1] : vector<16x32xf32> to vector<16xf32>
      %27 = vector.shape_cast %26 : vector<16xf32> to vector<16x1xf32>
      %cst_19 = arith.constant 3.200000e+01 : f32
      %28 = vector.broadcast %cst_19 : f32 to vector<16x1xf32>
      %29 = arith.divf %27, %28 : vector<16x1xf32>
      %30 = arith.mulf %24, %24 : vector<16x1xf32>
      %31 = arith.subf %29, %30 : vector<16x1xf32>
      %cst_20 = arith.constant 0.000000e+00 : f32
      %32 = vector.broadcast %cst_20 : f32 to vector<16x1xf32>
      %33 = arith.maximumf %31, %32 : vector<16x1xf32>
      %34 = vector.broadcast %24 : vector<16x1xf32> to vector<16x32xf32>
      %35 = arith.subf %20, %34 : vector<16x32xf32>
      %cst_21 = arith.constant 9.99999974E-6 : f32
      %36 = vector.broadcast %cst_21 : f32 to vector<16x1xf32>
      %37 = arith.addf %33, %36 : vector<16x1xf32>
      %38 = math.rsqrt %37 : vector<16x1xf32>
      %39 = vector.broadcast %38 : vector<16x1xf32> to vector<16x32xf32>
      %40 = arith.mulf %35, %39 : vector<16x32xf32>
      %c0_22 = arith.constant 0 : index
      %c0_23 = arith.constant 0 : index
      %41 = vector.load %arg5[%c0_22, %c0_23] : memref<1x32xf32, #tpu.memory_space<vmem>>, vector<1x32xf32>
      %42 = vector.broadcast %41 : vector<1x32xf32> to vector<16x32xf32>
      %43 = arith.mulf %40, %42 : vector<16x32xf32>
      %c0_24 = arith.constant 0 : index
      %c0_25 = arith.constant 0 : index
      %44 = vector.load %arg6[%c0_24, %c0_25] : memref<1x32xf32, #tpu.memory_space<vmem>>, vector<1x32xf32>
      %45 = vector.broadcast %44 : vector<1x32xf32> to vector<16x32xf32>
      %46 = arith.addf %43, %45 : vector<16x32xf32>
      %c0_26 = arith.constant 0 : index
      %c0_27 = arith.constant 0 : index
      %47 = vector.load %arg9[%c0_26, %c0_27] : memref<16x32xf32, #tpu.memory_space<vmem>>, vector<16x32xf32>
      tpu.vector_store %arg9[%c0_26, %c0_27], %46 {strides = array<i32>} : memref<16x32xf32, #tpu.memory_space<vmem>>, vector<16x32xf32>,
    } else {
    }
    %c0 = arith.constant 0 : index
    %c0_1 = arith.constant 0 : index
    %3 = vector.load %arg9[%c0, %c0_1] : memref<16x32xf32, #tpu.memory_space<vmem>>, vector<16x32xf32>
    %c0_2 = arith.constant 0 : index
    %c0_3 = arith.constant 0 : index
    %4 = vector.load %arg7[%c0_2, %c0_3] : memref<32x128xf32, #tpu.memory_space<vmem>>, vector<32x128xf32>
    %cst = arith.constant dense<0.000000e+00> : vector<16x128xf32>
    %5 = tpu.matmul %3, %4, %cst {dimension_numbers = #tpu.dot_dimension_numbers<[1], [0], [0], [1], [0, 0, 1, 1], [], []>} : vector<16x32xf32>, vector<32x128xf32>, vector<16x128xf32> -> vector<16x128xf32>
    %c0_4 = arith.constant 0 : index
    %c0_5 = arith.constant 0 : index
    %6 = vector.load %arg8[%c0_4, %c0_5] : memref<16x128xf32, #tpu.memory_space<vmem>>, vector<16x128xf32>
    tpu.vector_store %arg8[%c0_4, %c0_5], %5 {strides = array<i32>} : memref<16x128xf32, #tpu.memory_space<vmem>>, vector<16x128xf32>,
    return
  }
  func.func @transform_0(%arg0: i32, %arg1: i32) -> (i32, i32) {
    %c0_i32 = arith.constant 0 : i32
    %c0_i32_0 = arith.constant 0 : i32
    return %arg0, %c0_i32 : i32, i32
  }
  func.func @transform_1(%arg0: i32, %arg1: i32) -> (i32, i32) {
    %c0_i32 = arith.constant 0 : i32
    %c0_i32_0 = arith.constant 0 : i32
    %c0_i32_1 = arith.constant 0 : i32
    return %c0_i32, %c0_i32_0 : i32, i32
  }
  func.func @transform_2(%arg0: i32, %arg1: i32) -> (i32, i32) {
    %c0_i32 = arith.constant 0 : i32
    %c0_i32_0 = arith.constant 0 : i32
    %c0_i32_1 = arith.constant 0 : i32
    return %c0_i32, %c0_i32_0 : i32, i32
  }
  func.func @transform_3(%arg0: i32, %arg1: i32) -> (i32, i32) {
    %c0_i32 = arith.constant 0 : i32
    %c0_i32_0 = arith.constant 0 : i32
    %c0_i32_1 = arith.constant 0 : i32
    return %c0_i32, %c0_i32_0 : i32, i32
  }
  func.func @transform_4(%arg0: i32, %arg1: i32) -> (i32, i32) {
    %c0_i32 = arith.constant 0 : i32
    %c0_i32_0 = arith.constant 0 : i32
    %c0_i32_1 = arith.constant 0 : i32
    return %c0_i32, %c0_i32_0 : i32, i32
  }
  func.func @transform_5(%arg0: i32, %arg1: i32) -> (i32, i32) {
    %c0_i32 = arith.constant 0 : i32
    %c0_i32_0 = arith.constant 0 : i32
    return %c0_i32, %arg1 : i32, i32
  }
  func.func @transform_6(%arg0: i32, %arg1: i32) -> (i32, i32) {
    %c0_i32 = arith.constant 0 : i32
    return %arg0, %arg1 : i32, i32
  }
}

module attributes {stable_mosaic.version = 11 : i64} {
  func.func @_lm_layer_kernel(%arg0: i32, %arg1: i32, %arg2: memref<16x32xf32, #tpu.memory_space<vmem>>, %arg3: memref<32x32xf32, #tpu.memory_space<vmem>>, %arg4: memref<1x32xf32, #tpu.memory_space<vmem>>, %arg5: memref<1x32xf32, #tpu.memory_space<vmem>>, %arg6: memref<1x32xf32, #tpu.memory_space<vmem>>, %arg7: memref<32x128xf32, #tpu.memory_space<vmem>>, %arg8: memref<16x128xf32, #tpu.memory_space<vmem>>, %arg9: memref<16x32xf32, #tpu.memory_space<vmem>>) attributes {dimension_semantics = [#tpu.dimension_semantics<parallel>, #tpu.dimension_semantics<arbitrary>], iteration_bounds = array<i64: 1, 1>, scalar_prefetch = 0 : i64, scratch_operands = 1 : i64, tpu.core_type = #tpu.core_type<tc>, window_params = [{transform_indices = @transform_0, window_bounds = array<i64: 16, 32>}, {pipeline_mode = #tpu.pipeline_mode<synchronous>, transform_indices = @transform_1, window_bounds = array<i64: 32, 32>}, {pipeline_mode = #tpu.pipeline_mode<synchronous>, transform_indices = @transform_2, window_bounds = array<i64: 1, 32>}, {pipeline_mode = #tpu.pipeline_mode<synchronous>, transform_indices = @transform_3, window_bounds = array<i64: 1, 32>}, {pipeline_mode = #tpu.pipeline_mode<synchronous>, transform_indices = @transform_4, window_bounds = array<i64: 1, 32>}, {transform_indices = @transform_5, window_bounds = array<i64: 32, 128>}, {transform_indices = @transform_6, window_bounds = array<i64: 16, 128>}]} {
    %c0_i32 = arith.constant 0 : i32
    %0 = arith.cmpi eq, %arg1, %c0_i32 : i32
    %1 = arith.extui %0 : i1 to i32
    %c0_i32_0 = arith.constant 0 : i32
    %2 = arith.cmpi ne, %1, %c0_i32_0 : i32
    scf.if %2 {
      %c0_6 = arith.constant 0 : index
      %c0_7 = arith.constant 0 : index
      %7 = vector.load %arg2[%c0_6, %c0_7] : memref<16x32xf32, #tpu.memory_space<vmem>>, vector<16x32xf32>
      %c0_8 = arith.constant 0 : index
      %c0_9 = arith.constant 0 : index
      %8 = vector.load %arg3[%c0_8, %c0_9] : memref<32x32xf32, #tpu.memory_space<vmem>>, vector<32x32xf32>
      %cst_10 = arith.constant dense<0.000000e+00> : vector<16x32xf32>
      %9 = tpu.matmul %7, %8, %cst_10 {dimension_numbers = #tpu.dot_dimension_numbers<[1], [0], [0], [1], [0, 0, 1, 1], [], []>} : vector<16x32xf32>, vector<32x32xf32>, vector<16x32xf32> -> vector<16x32xf32>
      %c0_11 = arith.constant 0 : index
      %c0_12 = arith.constant 0 : index
      %10 = vector.load %arg4[%c0_11, %c0_12] : memref<1x32xf32, #tpu.memory_space<vmem>>, vector<1x32xf32>
      %11 = vector.broadcast %10 : vector<1x32xf32> to vector<16x32xf32>
      %12 = arith.addf %9, %11 : vector<16x32xf32>
      %cst_13 = arith.constant 5.000000e-01 : f32
      %13 = vector.broadcast %cst_13 : f32 to vector<16x32xf32>
      %14 = arith.mulf %13, %12 : vector<16x32xf32>
      %cst_14 = arith.constant 0.707106769 : f32
      %15 = vector.broadcast %cst_14 : f32 to vector<16x32xf32>
      %16 = arith.mulf %12, %15 : vector<16x32xf32>
      %17 = math.erf %16 : vector<16x32xf32>
      %cst_15 = arith.constant 1.000000e+00 : f32
      %18 = vector.broadcast %cst_15 : f32 to vector<16x32xf32>
      %19 = arith.addf %18, %17 : vector<16x32xf32>
      %20 = arith.mulf %14, %19 : vector<16x32xf32>
      %cst_16 = arith.constant dense<0.000000e+00> : vector<16xf32>
      %21 = vector.multi_reduction <add>, %20, %cst_16 [1] : vector<16x32xf32> to vector<16xf32>
      %22 = vector.shape_cast %21 : vector<16xf32> to vector<16x1xf32>
      %cst_17 = arith.constant 3.200000e+01 : f32
      %23 = vector.broadcast %cst_17 : f32 to vector<16x1xf32>
      %24 = arith.divf %22, %23 : vector<16x1xf32>
      %25 = arith.mulf %20, %20 : vector<16x32xf32>
      %cst_18 = arith.constant dense<0.000000e+00> : vector<16xf32>
      %26 = vector.multi_reduction <add>, %25, %cst_18 [1] : vector<16x32xf32> to vector<16xf32>
      %27 = vector.shape_cast %26 : vector<16xf32> to vector<16x1xf32>
      %cst_19 = arith.constant 3.200000e+01 : f32
      %28 = vector.broadcast %cst_19 : f32 to vector<16x1xf32>
      %29 = arith.divf %27, %28 : vector<16x1xf32>
      %30 = arith.mulf %24, %24 : vector<16x1xf32>
      %31 = arith.subf %29, %30 : vector<16x1xf32>
      %cst_20 = arith.constant 0.000000e+00 : f32
      %32 = vector.broadcast %cst_20 : f32 to vector<16x1xf32>
      %33 = arith.maximumf %31, %32 : vector<16x1xf32>
      %34 = vector.broadcast %24 : vector<16x1xf32> to vector<16x32xf32>
      %35 = arith.subf %20, %34 : vector<16x32xf32>
      %cst_21 = arith.constant 9.99999974E-6 : f32
      %36 = vector.broadcast %cst_21 : f32 to vector<16x1xf32>
      %37 = arith.addf %33, %36 : vector<16x1xf32>
      %38 = math.rsqrt %37 : vector<16x1xf32>
      %39 = vector.broadcast %38 : vector<16x1xf32> to vector<16x32xf32>
      %40 = arith.mulf %35, %39 : vector<16x32xf32>
      %c0_22 = arith.constant 0 : index
      %c0_23 = arith.constant 0 : index
      %41 = vector.load %arg5[%c0_22, %c0_23] : memref<1x32xf32, #tpu.memory_space<vmem>>, vector<1x32xf32>
      %42 = vector.broadcast %41 : vector<1x32xf32> to vector<16x32xf32>
      %43 = arith.mulf %40, %42 : vector<16x32xf32>
      %c0_24 = arith.constant 0 : index
      %c0_25 = arith.constant 0 : index
      %44 = vector.load %arg6[%c0_24, %c0_25] : memref<1x32xf32, #tpu.memory_space<vmem>>, vector<1x32xf32>
      %45 = vector.broadcast %44 : vector<1x32xf32> to vector<16x32xf32>
      %46 = arith.addf %43, %45 : vector<16x32xf32>
      %c0_26 = arith.constant 0 : index
      %c0_27 = arith.constant 0 : index
      %47 = vector.load %arg9[%c0_26, %c0_27] : memref<16x32xf32, #tpu.memory_space<vmem>>, vector<16x32xf32>
      tpu.vector_store %arg9[%c0_26, %c0_27], %46 {strides = array<i32>} : memref<16x32xf32, #tpu.memory_space<vmem>>, vector<16x32xf32>,
    } else {
    }
    %c0 = arith.constant 0 : index
    %c0_1 = arith.constant 0 : index
    %3 = vector.load %arg9[%c0, %c0_1] : memref<16x32xf32, #tpu.memory_space<vmem>>, vector<16x32xf32>
    %c0_2 = arith.constant 0 : index
    %c0_3 = arith.constant 0 : index
    %4 = vector.load %arg7[%c0_2, %c0_3] : memref<32x128xf32, #tpu.memory_space<vmem>>, vector<32x128xf32>
    %cst = arith.constant dense<0.000000e+00> : vector<16x128xf32>
    %5 = tpu.matmul %3, %4, %cst {dimension_numbers = #tpu.dot_dimension_numbers<[1], [0], [0], [1], [0, 0, 1, 1], [], []>} : vector<16x32xf32>, vector<32x128xf32>, vector<16x128xf32> -> vector<16x128xf32>
    %c0_4 = arith.constant 0 : index
    %c0_5 = arith.constant 0 : index
    %6 = vector.load %arg8[%c0_4, %c0_5] : memref<16x128xf32, #tpu.memory_space<vmem>>, vector<16x128xf32>
    tpu.vector_store %arg8[%c0_4, %c0_5], %5 {strides = array<i32>} : memref<16x128xf32, #tpu.memory_space<vmem>>, vector<16x128xf32>,
    return
  }
  func.func @transform_0(%arg0: i32, %arg1: i32) -> (i32, i32) {
    %c0_i32 = arith.constant 0 : i32
    %c0_i32_0 = arith.constant 0 : i32
    return %arg0, %c0_i32 : i32, i32
  }
  func.func @transform_1(%arg0: i32, %arg1: i32) -> (i32, i32) {
    %c0_i32 = arith.constant 0 : i32
    %c0_i32_0 = arith.constant 0 : i32
    %c0_i32_1 = arith.constant 0 : i32
    return %c0_i32, %c0_i32_0 : i32, i32
  }
  func.func @transform_2(%arg0: i32, %arg1: i32) -> (i32, i32) {
    %c0_i32 = arith.constant 0 : i32
    %c0_i32_0 = arith.constant 0 : i32
    %c0_i32_1 = arith.constant 0 : i32
    return %c0_i32, %c0_i32_0 : i32, i32
  }
  func.func @transform_3(%arg0: i32, %arg1: i32) -> (i32, i32) {
    %c0_i32 = arith.constant 0 : i32
    %c0_i32_0 = arith.constant 0 : i32
    %c0_i32_1 = arith.constant 0 : i32
    return %c0_i32, %c0_i32_0 : i32, i32
  }
  func.func @transform_4(%arg0: i32, %arg1: i32) -> (i32, i32) {
    %c0_i32 = arith.constant 0 : i32
    %c0_i32_0 = arith.constant 0 : i32
    %c0_i32_1 = arith.constant 0 : i32
    return %c0_i32, %c0_i32_0 : i32, i32
  }
  func.func @transform_5(%arg0: i32, %arg1: i32) -> (i32, i32) {
    %c0_i32 = arith.constant 0 : i32
    %c0_i32_0 = arith.constant 0 : i32
    return %c0_i32, %arg1 : i32, i32
  }
  func.func @transform_6(%arg0: i32, %arg1: i32) -> (i32, i32) {
    %c0_i32 = arith.constant 0 : i32
    return %arg0, %arg1 : i32, i32
  }
}

</mosaic_0001>

<llo_original>
// kernel: lm_layer_pallas.1
$region0: #{lm_layer_pallas.1}
  #allocation0 [shape = 'u32[]', space=smem, size = 0x4, offset = 0x4, fixed_abs, tag = 'smem constant byte address 0x4 - core index']
  #allocation1 [shape = 'u32[144,128]{1,0:T(1,128)}', space=vmem, size = 0x12000, scoped, tag = 'internal scratch']
  #allocation2 [shape = 'f32[16,32]{1,0:T(8,128)}', space=vmem, size = 0x2000, scoped, tag = 'scratch operand']
  %s0 = inlined_call_operand.vmem [shape: f32[16,32], index: 0, kind: input, shape index: {}]
  %s1 = inlined_call_operand.vmem [shape: f32[32,32], index: 1, kind: input, shape index: {}]
  %s2 = inlined_call_operand.vmem [shape: f32[1,32], index: 2, kind: input, shape index: {}]
  %s3 = inlined_call_operand.vmem [shape: f32[1,32], index: 3, kind: input, shape index: {}]
  %s4 = inlined_call_operand.vmem [shape: f32[1,32], index: 4, kind: input, shape index: {}]
  %s5 = inlined_call_operand.vmem [shape: f32[32,128], index: 5, kind: input, shape index: {}]
  %s6 = inlined_call_operand.hbm [shape: f32[16,128], index: 6, kind: output, shape index: {}]
  %s7 = sld [smem:[#allocation0]]
  $region38: #{lm_layer_pallas.1} parent=0
    _
  %s9 = ssub.s32 1, %s7
  %s10 = scalar_select 0, %s9, %s7
  $region1: #{lm_layer_pallas.1} parent=0
    #allocation3 [shape = 'u8[8192]{0}', space=vmem, size = 0x2000, scoped, tag = 'output window, operand 0, single buffered']
    #allocation4 [shape = 's32[1]{0}', space=sflag, size = 0x4, scoped, tag = 'scoped memory for lm_layer_pallas.1']
    %11 = vsyncpa [#allocation4], 0
    // Predicated region
    $region2: #{lm_layer_pallas.1} parent=1 // pred_check
      _
    $region3: #{lm_layer_pallas.1} parent=1 // pred_check_branch
      %13 = sbr.rel (0) target = $region5
    $region4: #{lm_layer_pallas.1} parent=1 // pred_region
      _
    $region5: #{lm_layer_pallas.1} parent=1 // pred_fallthru
      _
    // Predicated region
    $region6: #{lm_layer_pallas.1} parent=1 // pred_check
      _
    $region7: #{lm_layer_pallas.1} parent=1 // pred_check_branch
      %15 = sbr.rel (0) target = $region9
    $region8: #{lm_layer_pallas.1} parent=1 // pred_region
      _
    $region9: #{lm_layer_pallas.1} parent=1 // pred_fallthru
      _
    // Predicated region
    $region10: #{lm_layer_pallas.1} parent=1 // pred_check
      _
    $region11: #{lm_layer_pallas.1} parent=1 // pred_check_branch
      %17 = sbr.rel (0) target = $region13
    $region12: #{lm_layer_pallas.1} parent=1 // pred_region
      _
    $region13: #{lm_layer_pallas.1} parent=1 // pred_fallthru
      _
    // Predicated region
    $region14: #{lm_layer_pallas.1} parent=1 // pred_check
      _
    $region15: #{lm_layer_pallas.1} parent=1 // pred_check_branch
      %19 = sbr.rel (0) target = $region17
    $region16: #{lm_layer_pallas.1} parent=1 // pred_region
      _
    $region17: #{lm_layer_pallas.1} parent=1 // pred_fallthru
      _
    // Predicated region
    $region18: #{lm_layer_pallas.1} parent=1 // pred_check
      _
    $region19: #{lm_layer_pallas.1} parent=1 // pred_check_branch
      %21 = sbr.rel (0) target = $region21
    $region20: #{lm_layer_pallas.1} parent=1 // pred_region
      _
    $region21: #{lm_layer_pallas.1} parent=1 // pred_fallthru
      _
    // Predicated region
    $region22: #{lm_layer_pallas.1} parent=1 // pred_check
      _
    $region23: #{lm_layer_pallas.1} parent=1 // pred_check_branch
      %23 = sbr.rel (0) target = $region25
    $region24: #{lm_layer_pallas.1} parent=1 // pred_region
      _
    $region25: #{lm_layer_pallas.1} parent=1 // pred_fallthru
      _
    %p24 = scmp.eq.s32.totalorder 0, 0
    // Predicated region
    $region26: #{lm_layer_pallas.1} parent=1 // pred_check
      %p25 = pneg %p24
    $region27: #{lm_layer_pallas.1} parent=1 // pred_check_branch
      %27 = sbr.rel (%p25) target = $region29
    $region28: #{lm_layer_pallas.1} parent=1 // pred_region
      %v28 = vld [vmem:[%s0] sm:$0xff]
      %v29 = vld [vmem:[%s0 + $0x8] sm:$0xff]
      %v30 = vld [vmem:[%s1] sm:$0xff]
      %v31 = vld [vmem:[%s1 + $0x8] sm:$0xff]
      %v32 = vld [vmem:[%s1 + $0x10] sm:$0xff]
      %v33 = vld [vmem:[%s1 + $0x18] sm:$0xff]
      %v34 = vld [vmem:[%s2] sm:$0x1]
      %v36 = vlaneseq
      %v37 = vshrl.u32 %v36, 7
      %v38 = vsub.s32 0, %v37
      %v39 = vrot.slane %v34, %v38
      %vm41 = vcmask 261120
      %v43 = vsel %vm41, %v28, 0
      %v46 = vsel %vm41, %v29, 0
      %48 = vmatprep.subr.mxu0 0.0
      %49 = vmatpush1.msra.mxu0 %v30
      %50 = vmatprep.subr.mxu0 0.0
      %51 = vmatpush1.msra.mxu0 %v31
      %52 = vmatprep.subr.mxu0 0.0
      %53 = vmatpush1.msra.mxu0 %v32
      %54 = vmatprep.subr.mxu0 0.0
      %55 = vmatpush1.msra.mxu0 %v33
      %56 = vmatprep.subr.mxu0 0.0
      %57 = vmatpush1.msra.mxu0 0.0
      %58 = vmatprep.subr.mxu0 0.0
      %59 = vmatpush1.msra.mxu0 0.0
      %60 = vmatprep.subr.mxu0 0.0
      %61 = vmatpush1.msra.mxu0 0.0
      %62 = vmatprep.subr.mxu0 0.0
      %63 = vmatpush1.msra.mxu0 0.0
      %64 = vmatprep.subr.mxu0 0.0
      %65 = vmatpush1.msra.mxu0 0.0
      %66 = vmatprep.subr.mxu0 0.0
      %67 = vmatpush1.msra.mxu0 0.0
      %68 = vmatprep.subr.mxu0 0.0
      %69 = vmatpush1.msra.mxu0 0.0
      %70 = vmatprep.subr.mxu0 0.0
      %71 = vmatpush1.msra.mxu0 0.0
      %72 = vmatprep.subr.mxu0 0.0
      %73 = vmatpush1.msra.mxu0 0.0
      %74 = vmatprep.subr.mxu0 0.0
      %75 = vmatpush1.msra.mxu0 0.0
      %76 = vmatprep.subr.mxu0 0.0
      %77 = vmatpush1.msra.mxu0 0.0
      %78 = vmatprep.subr.mxu0 0.0
      %79 = vmatpush1.msra.mxu0 0.0
      %80 = vmatprep.subr.mxu0 0.0
      %81 = vmatpush1.msra.mxu0 0.0
      %82 = vmatprep.subr.mxu0 0.0
      %83 = vmatpush1.msra.mxu0 0.0
      %84 = vmatprep.subr.mxu0 0.0
      %85 = vmatpush1.msra.mxu0 0.0
      %86 = vmatprep.subr.mxu0 0.0
      %87 = vmatpush1.msra.mxu0 0.0
      %88 = vmatprep.subr.mxu0 0.0
      %89 = vmatpush1.msra.mxu0 0.0
      %90 = vmatprep.subr.mxu0 0.0
      %91 = vmatpush1.msra.mxu0 0.0
      %92 = vmatprep.subr.mxu0 0.0
      %93 = vmatpush1.msra.mxu0 0.0
      %94 = vmatprep.subr.mxu0 0.0
      %95 = vmatpush1.msra.mxu0 0.0
      %96 = vmatprep.subr.mxu0 0.0
      %97 = vmatpush1.msra.mxu0 0.0
      %98 = vmatprep.subr.mxu0 0.0
      %99 = vmatpush1.msra.mxu0 0.0
      %100 = vmatprep.subr.mxu0 0.0
      %101 = vmatpush1.msra.mxu0 0.0
      %102 = vmatprep.subr.mxu0 0.0
      %103 = vmatpush1.msra.mxu0 0.0
      %104 = vmatprep.subr.mxu0 0.0
      %105 = vmatpush1.msra.mxu0 0.0
      %106 = vmatprep.subr.mxu0 0.0
      %107 = vmatpush1.msra.mxu0 0.0
      %108 = vmatprep.subr.mxu0 0.0
      %109 = vmatpush1.msra.mxu0 0.0
      %110 = vmatprep.subr.mxu0 0.0
      %111 = vmatpush1.msra.mxu0 0.0
      %112 = vmatprep.mubr.f32.mxu0 0.0
      %113 = vmatmul.mubr.f32.gmra.mrb[0].mxu0 %v43
      %v114 = vpop.f32.mrb[0].mxu0
      %v115 = vadd.f32 %v39, %v114
      %v116 = vpop.f32.mrb[0].mxu0
      %117 = vmatprep.mubr.f32.mxu0 0.0
      %118 = vmatmul.mubr.f32.gmra.mrb[0].mxu0 %v46
      %v119 = vpop.f32.mrb[0].mxu0
      %v120 = vadd.f32 %v39, %v119
      %v121 = vpop.f32.mrb[0].mxu0
      %122 = vdwg.mxu0
      %v123 = vmul.f32 %v115, 0.5
      %v124 = vmul.f32 %v120, 0.5
      %v125 = vmul.f32 %v115, 0.70710677
      %v126 = vmul.f32 %v120, 0.70710677
      %v127 = verf.f32.pop %v125
      %v128 = verf.f32.pop %v126
      %v129 = vadd.f32 %v127, 1.0
      %v130 = vadd.f32 %v128, 1.0
      %v131 = vmul.f32 %v123, %v129
      %v132 = vmul.f32 %v124, %v130
      %v133 = vsel %vm41, %v131, 0.0
      %134 = vadd.xlane.f32.xlu0 %v133
      %v135 = vpop.xlane.xlu0 %134
      %v136 = vsel %vm41, %v132, 0.0
      %137 = vadd.xlane.f32.xlu0 %v136
      %v138 = vpop.xlane.xlu0 %137
      %v139 = vrcp.pop 32.0
      %v140 = vmul.f32 %v135, %v139
      %v141 = vmul.f32 %v138, %v139
      %v142 = vmul.f32 %v131, %v131
      %v143 = vmul.f32 %v132, %v132
      %v144 = vsel %vm41, %v142, 0.0
      %145 = vadd.xlane.f32.xlu0 %v144
      %v146 = vpop.xlane.xlu0 %145
      %v147 = vsel %vm41, %v143, 0.0
      %148 = vadd.xlane.f32.xlu0 %v147
      %v149 = vpop.xlane.xlu0 %148
      %v150 = vmul.f32 %v146, %v139
      %v151 = vmul.f32 %v149, %v139
      %v152 = vmul.f32 %v140, %v140
      %v153 = vmul.f32 %v141, %v141
      %v154 = vsub.f32 %v150, %v152
      %v155 = vsub.f32 %v151, %v153
      %v156 = vmax.f32 %v154, 0.0
      %v157 = vmax.f32 %v155, 0.0
      %v158 = vsub.f32 %v131, %v140
      %v159 = vsub.f32 %v132, %v141
      %v160 = vadd.f32 %v156, 1e-05
      %v161 = vadd.f32 %v157, 1e-05
      %v162 = vrsqrt.pop %v160
      %v163 = vrsqrt.pop %v161
      %v164 = vmul.f32 %v158, %v162
      %v165 = vmul.f32 %v159, %v163
      %v166 = vld [vmem:[%s3] sm:$0x1]
      %v168 = vlaneseq
      %v169 = vshrl.u32 %v168, 7
      %v170 = vsub.s32 0, %v169
      %v171 = vrot.slane %v166, %v170
      %v173 = vmul.f32 %v164, %v171
      %v174 = vmul.f32 %v165, %v171
      %v175 = vld [vmem:[%s4] sm:$0x1]
      %v177 = vlaneseq
      %v178 = vshrl.u32 %v177, 7
      %v179 = vsub.s32 0, %v178
      %v180 = vrot.slane %v175, %v179
      %v182 = vadd.f32 %v173, %v180
      %v183 = vadd.f32 %v174, %v180
      %184 = vst.msk [vmem:[#allocation2] sm:$0xff] %vm41, %v182
      %185 = vst.msk [vmem:[#allocation2 + $0x8] sm:$0xff] %vm41, %v183
    $region29: #{lm_layer_pallas.1} parent=1 // pred_fallthru
      _
    %v186 = vld [vmem:[#allocation2] sm:$0xff]
    %v187 = vld [vmem:[#allocation2 + $0x8] sm:$0xff]
    %v188 = vld [vmem:[%s5] sm:$0xff]
    %v189 = vld [vmem:[%s5 + $0x8] sm:$0xff]
    %v190 = vld [vmem:[%s5 + $0x10] sm:$0xff]
    %v191 = vld [vmem:[%s5 + $0x18] sm:$0xff]
    %vm192 = vcmask 261120
    %v194 = vsel %vm192, %v186, 0
    %v197 = vsel %vm192, %v187, 0
    %199 = vmatprep.subr.mxu0 0.0
    %200 = vmatpush1.msra.mxu0 %v188
    %201 = vmatprep.subr.mxu0 0.0
    %202 = vmatpush1.msra.mxu0 %v189
    %203 = vmatprep.subr.mxu0 0.0
    %204 = vmatpush1.msra.mxu0 %v190
    %205 = vmatprep.subr.mxu0 0.0
    %206 = vmatpush1.msra.mxu0 %v191
    %207 = vmatprep.subr.mxu0 0.0
    %208 = vmatpush1.msra.mxu0 0.0
    %209 = vmatprep.subr.mxu0 0.0
    %210 = vmatpush1.msra.mxu0 0.0
    %211 = vmatprep.subr.mxu0 0.0
    %212 = vmatpush1.msra.mxu0 0.0
    %213 = vmatprep.subr.mxu0 0.0
    %214 = vmatpush1.msra.mxu0 0.0
    %215 = vmatprep.subr.mxu0 0.0
    %216 = vmatpush1.msra.mxu0 0.0
    %217 = vmatprep.subr.mxu0 0.0
    %218 = vmatpush1.msra.mxu0 0.0
    %219 = vmatprep.subr.mxu0 0.0
    %220 = vmatpush1.msra.mxu0 0.0
    %221 = vmatprep.subr.mxu0 0.0
    %222 = vmatpush1.msra.mxu0 0.0
    %223 = vmatprep.subr.mxu0 0.0
    %224 = vmatpush1.msra.mxu0 0.0
    %225 = vmatprep.subr.mxu0 0.0
    %226 = vmatpush1.msra.mxu0 0.0
    %227 = vmatprep.subr.mxu0 0.0
    %228 = vmatpush1.msra.mxu0 0.0
    %229 = vmatprep.subr.mxu0 0.0
    %230 = vmatpush1.msra.mxu0 0.0
    %231 = vmatprep.subr.mxu0 0.0
    %232 = vmatpush1.msra.mxu0 0.0
    %233 = vmatprep.subr.mxu0 0.0
    %234 = vmatpush1.msra.mxu0 0.0
    %235 = vmatprep.subr.mxu0 0.0
    %236 = vmatpush1.msra.mxu0 0.0
    %237 = vmatprep.subr.mxu0 0.0
    %238 = vmatpush1.msra.mxu0 0.0
    %239 = vmatprep.subr.mxu0 0.0
    %240 = vmatpush1.msra.mxu0 0.0
    %241 = vmatprep.subr.mxu0 0.0
    %242 = vmatpush1.msra.mxu0 0.0
    %243 = vmatprep.subr.mxu0 0.0
    %244 = vmatpush1.msra.mxu0 0.0
    %245 = vmatprep.subr.mxu0 0.0
    %246 = vmatpush1.msra.mxu0 0.0
    %247 = vmatprep.subr.mxu0 0.0
    %248 = vmatpush1.msra.mxu0 0.0
    %249 = vmatprep.subr.mxu0 0.0
    %250 = vmatpush1.msra.mxu0 0.0
    %251 = vmatprep.subr.mxu0 0.0
    %252 = vmatpush1.msra.mxu0 0.0
    %253 = vmatprep.subr.mxu0 0.0
    %254 = vmatpush1.msra.mxu0 0.0
    %255 = vmatprep.subr.mxu0 0.0
    %256 = vmatpush1.msra.mxu0 0.0
    %257 = vmatprep.subr.mxu0 0.0
    %258 = vmatpush1.msra.mxu0 0.0
    %259 = vmatprep.subr.mxu0 0.0
    %260 = vmatpush1.msra.mxu0 0.0
    %261 = vmatprep.subr.mxu0 0.0
    %262 = vmatpush1.msra.mxu0 0.0
    %263 = vmatprep.mubr.f32.mxu0 0.0
    %264 = vmatmul.mubr.f32.gmra.mrb[0].mxu0 %v194
    %v265 = vpop.f32.mrb[0].mxu0
    %v266 = vadd.f32 0.0, %v265
    %v267 = vpop.f32.mrb[0].mxu0
    %268 = vmatprep.mubr.f32.mxu0 0.0
    %269 = vmatmul.mubr.f32.gmra.mrb[0].mxu0 %v197
    %v270 = vpop.f32.mrb[0].mxu0
    %v271 = vadd.f32 0.0, %v270
    %v272 = vpop.f32.mrb[0].mxu0
    %273 = vdwg.mxu0
    %274 = vst [vmem:[#allocation3] sm:$0xff] %v266
    %275 = vst [vmem:[#allocation3 + $0x8] sm:$0xff] %v271
    // Predicated region
    $region30: #{lm_layer_pallas.1} parent=1 // pred_check
      _
    $region31: #{lm_layer_pallas.1} parent=1 // pred_check_branch
      %277 = sbr.rel (0) target = $region33
    $region32: #{lm_layer_pallas.1} parent=1 // pred_region
      %s279 = ssub.s32 256, 256
      %280 = vsyncadd [#allocation4], %s279
      %s281 = sshll.u32 [#allocation3], 4
      %s282 = int_to_ptr.vmem [resolvable:$true] %s281
      %287 = dma.vmem_to_hbm [thread:$0]  %s282, 256, %s6, [#allocation4], 128, 128, 8
    $region33: #{lm_layer_pallas.1} parent=1 // pred_fallthru
      _
    // Predicated region
    $region34: #{lm_layer_pallas.1} parent=1 // pred_check
      _
    $region35: #{lm_layer_pallas.1} parent=1 // pred_check_branch
      %289 = sbr.rel (0) target = $region37
    $region36: #{lm_layer_pallas.1} parent=1 // pred_region
      %290 = dma.done [#allocation4], 256
    $region37: #{lm_layer_pallas.1} parent=1 // pred_fallthru
      _
    %291 = vsyncpa [#allocation4], 1

// kernel: lm_layer_pallas.1
$region0: #{lm_layer_pallas.1}
  #allocation0 [shape = 'u32[]', space=smem, size = 0x4, offset = 0x4, fixed_abs, tag = 'smem constant byte address 0x4 - core index']
  #allocation1 [shape = 'u32[144,128]{1,0:T(1,128)}', space=vmem, size = 0x12000, scoped, tag = 'internal scratch']
  #allocation2 [shape = 'f32[16,32]{1,0:T(8,128)}', space=vmem, size = 0x2000, scoped, tag = 'scratch operand']
  %s0 = inlined_call_operand.vmem [shape: f32[16,32], index: 0, kind: input, shape index: {}]
  %s1 = inlined_call_operand.vmem [shape: f32[32,32], index: 1, kind: input, shape index: {}]
  %s2 = inlined_call_operand.vmem [shape: f32[1,32], index: 2, kind: input, shape index: {}]
  %s3 = inlined_call_operand.vmem [shape: f32[1,32], index: 3, kind: input, shape index: {}]
  %s4 = inlined_call_operand.vmem [shape: f32[1,32], index: 4, kind: input, shape index: {}]
  %s5 = inlined_call_operand.vmem [shape: f32[32,128], index: 5, kind: input, shape index: {}]
  %s6 = inlined_call_operand.hbm [shape: f32[16,128], index: 6, kind: output, shape index: {}]
  %s7 = sld [smem:[#allocation0]]
  $region38: #{lm_layer_pallas.1} parent=0
    _
  %s9 = ssub.s32 1, %s7
  %s10 = scalar_select 0, %s9, %s7
  $region1: #{lm_layer_pallas.1} parent=0
    #allocation3 [shape = 'u8[8192]{0}', space=vmem, size = 0x2000, scoped, tag = 'output window, operand 0, single buffered']
    #allocation4 [shape = 's32[1]{0}', space=sflag, size = 0x4, scoped, tag = 'scoped memory for lm_layer_pallas.1']
    %11 = vsyncpa [#allocation4], 0
    // Predicated region
    $region2: #{lm_layer_pallas.1} parent=1 // pred_check
      _
    $region3: #{lm_layer_pallas.1} parent=1 // pred_check_branch
      %13 = sbr.rel (0) target = $region5
    $region4: #{lm_layer_pallas.1} parent=1 // pred_region
      _
    $region5: #{lm_layer_pallas.1} parent=1 // pred_fallthru
      _
    // Predicated region
    $region6: #{lm_layer_pallas.1} parent=1 // pred_check
      _
    $region7: #{lm_layer_pallas.1} parent=1 // pred_check_branch
      %15 = sbr.rel (0) target = $region9
    $region8: #{lm_layer_pallas.1} parent=1 // pred_region
      _
    $region9: #{lm_layer_pallas.1} parent=1 // pred_fallthru
      _
    // Predicated region
    $region10: #{lm_layer_pallas.1} parent=1 // pred_check
      _
    $region11: #{lm_layer_pallas.1} parent=1 // pred_check_branch
      %17 = sbr.rel (0) target = $region13
    $region12: #{lm_layer_pallas.1} parent=1 // pred_region
      _
    $region13: #{lm_layer_pallas.1} parent=1 // pred_fallthru
      _
    // Predicated region
    $region14: #{lm_layer_pallas.1} parent=1 // pred_check
      _
    $region15: #{lm_layer_pallas.1} parent=1 // pred_check_branch
      %19 = sbr.rel (0) target = $region17
    $region16: #{lm_layer_pallas.1} parent=1 // pred_region
      _
    $region17: #{lm_layer_pallas.1} parent=1 // pred_fallthru
      _
    // Predicated region
    $region18: #{lm_layer_pallas.1} parent=1 // pred_check
      _
    $region19: #{lm_layer_pallas.1} parent=1 // pred_check_branch
      %21 = sbr.rel (0) target = $region21
    $region20: #{lm_layer_pallas.1} parent=1 // pred_region
      _
    $region21: #{lm_layer_pallas.1} parent=1 // pred_fallthru
      _
    // Predicated region
    $region22: #{lm_layer_pallas.1} parent=1 // pred_check
      _
    $region23: #{lm_layer_pallas.1} parent=1 // pred_check_branch
      %23 = sbr.rel (0) target = $region25
    $region24: #{lm_layer_pallas.1} parent=1 // pred_region
      _
    $region25: #{lm_layer_pallas.1} parent=1 // pred_fallthru
      _
    %p24 = scmp.eq.s32.totalorder 0, 0
    // Predicated region
    $region26: #{lm_layer_pallas.1} parent=1 // pred_check
      %p25 = pneg %p24
    $region27: #{lm_layer_pallas.1} parent=1 // pred_check_branch
      %27 = sbr.rel (%p25) target = $region29
    $region28: #{lm_layer_pallas.1} parent=1 // pred_region
      %v28 = vld [vmem:[%s0] sm:$0xff]
      %v29 = vld [vmem:[%s0 + $0x8] sm:$0xff]
      %v30 = vld [vmem:[%s1] sm:$0xff]
      %v31 = vld [vmem:[%s1 + $0x8] sm:$0xff]
      %v32 = vld [vmem:[%s1 + $0x10] sm:$0xff]
      %v33 = vld [vmem:[%s1 + $0x18] sm:$0xff]
      %v34 = vld [vmem:[%s2] sm:$0x1]
      %v36 = vlaneseq
      %v37 = vshrl.u32 %v36, 7
      %v38 = vsub.s32 0, %v37
      %v39 = vrot.slane %v34, %v38
      %vm41 = vcmask 261120
      %v43 = vsel %vm41, %v28, 0
      %v46 = vsel %vm41, %v29, 0
      %48 = vmatprep.subr.mxu0 0.0
      %49 = vmatpush1.msra.mxu0 %v30
      %50 = vmatprep.subr.mxu0 0.0
      %51 = vmatpush1.msra.mxu0 %v31
      %52 = vmatprep.subr.mxu0 0.0
      %53 = vmatpush1.msra.mxu0 %v32
      %54 = vmatprep.subr.mxu0 0.0
      %55 = vmatpush1.msra.mxu0 %v33
      %56 = vmatprep.subr.mxu0 0.0
      %57 = vmatpush1.msra.mxu0 0.0
      %58 = vmatprep.subr.mxu0 0.0
      %59 = vmatpush1.msra.mxu0 0.0
      %60 = vmatprep.subr.mxu0 0.0
      %61 = vmatpush1.msra.mxu0 0.0
      %62 = vmatprep.subr.mxu0 0.0
      %63 = vmatpush1.msra.mxu0 0.0
      %64 = vmatprep.subr.mxu0 0.0
      %65 = vmatpush1.msra.mxu0 0.0
      %66 = vmatprep.subr.mxu0 0.0
      %67 = vmatpush1.msra.mxu0 0.0
      %68 = vmatprep.subr.mxu0 0.0
      %69 = vmatpush1.msra.mxu0 0.0
      %70 = vmatprep.subr.mxu0 0.0
      %71 = vmatpush1.msra.mxu0 0.0
      %72 = vmatprep.subr.mxu0 0.0
      %73 = vmatpush1.msra.mxu0 0.0
      %74 = vmatprep.subr.mxu0 0.0
      %75 = vmatpush1.msra.mxu0 0.0
      %76 = vmatprep.subr.mxu0 0.0
      %77 = vmatpush1.msra.mxu0 0.0
      %78 = vmatprep.subr.mxu0 0.0
      %79 = vmatpush1.msra.mxu0 0.0
      %80 = vmatprep.subr.mxu0 0.0
      %81 = vmatpush1.msra.mxu0 0.0
      %82 = vmatprep.subr.mxu0 0.0
      %83 = vmatpush1.msra.mxu0 0.0
      %84 = vmatprep.subr.mxu0 0.0
      %85 = vmatpush1.msra.mxu0 0.0
      %86 = vmatprep.subr.mxu0 0.0
      %87 = vmatpush1.msra.mxu0 0.0
      %88 = vmatprep.subr.mxu0 0.0
      %89 = vmatpush1.msra.mxu0 0.0
      %90 = vmatprep.subr.mxu0 0.0
      %91 = vmatpush1.msra.mxu0 0.0
      %92 = vmatprep.subr.mxu0 0.0
      %93 = vmatpush1.msra.mxu0 0.0
      %94 = vmatprep.subr.mxu0 0.0
      %95 = vmatpush1.msra.mxu0 0.0
      %96 = vmatprep.subr.mxu0 0.0
      %97 = vmatpush1.msra.mxu0 0.0
      %98 = vmatprep.subr.mxu0 0.0
      %99 = vmatpush1.msra.mxu0 0.0
      %100 = vmatprep.subr.mxu0 0.0
      %101 = vmatpush1.msra.mxu0 0.0
      %102 = vmatprep.subr.mxu0 0.0
      %103 = vmatpush1.msra.mxu0 0.0
      %104 = vmatprep.subr.mxu0 0.0
      %105 = vmatpush1.msra.mxu0 0.0
      %106 = vmatprep.subr.mxu0 0.0
      %107 = vmatpush1.msra.mxu0 0.0
      %108 = vmatprep.subr.mxu0 0.0
      %109 = vmatpush1.msra.mxu0 0.0
      %110 = vmatprep.subr.mxu0 0.0
      %111 = vmatpush1.msra.mxu0 0.0
      %112 = vmatprep.mubr.f32.mxu0 0.0
      %113 = vmatmul.mubr.f32.gmra.mrb[0].mxu0 %v43
      %v114 = vpop.f32.mrb[0].mxu0
      %v115 = vadd.f32 %v39, %v114
      %v116 = vpop.f32.mrb[0].mxu0
      %117 = vmatprep.mubr.f32.mxu0 0.0
      %118 = vmatmul.mubr.f32.gmra.mrb[0].mxu0 %v46
      %v119 = vpop.f32.mrb[0].mxu0
      %v120 = vadd.f32 %v39, %v119
      %v121 = vpop.f32.mrb[0].mxu0
      %122 = vdwg.mxu0
      %v123 = vmul.f32 %v115, 0.5
      %v124 = vmul.f32 %v120, 0.5
      %v125 = vmul.f32 %v115, 0.70710677
      %v126 = vmul.f32 %v120, 0.70710677
      %v127 = verf.f32.pop %v125
      %v128 = verf.f32.pop %v126
      %v129 = vadd.f32 %v127, 1.0
      %v130 = vadd.f32 %v128, 1.0
      %v131 = vmul.f32 %v123, %v129
      %v132 = vmul.f32 %v124, %v130
      %v133 = vsel %vm41, %v131, 0.0
      %134 = vadd.xlane.f32.xlu0 %v133
      %v135 = vpop.xlane.xlu0 %134
      %v136 = vsel %vm41, %v132, 0.0
      %137 = vadd.xlane.f32.xlu0 %v136
      %v138 = vpop.xlane.xlu0 %137
      %v139 = vrcp.pop 32.0
      %v140 = vmul.f32 %v135, %v139
      %v141 = vmul.f32 %v138, %v139
      %v142 = vmul.f32 %v131, %v131
      %v143 = vmul.f32 %v132, %v132
      %v144 = vsel %vm41, %v142, 0.0
      %145 = vadd.xlane.f32.xlu0 %v144
      %v146 = vpop.xlane.xlu0 %145
      %v147 = vsel %vm41, %v143, 0.0
      %148 = vadd.xlane.f32.xlu0 %v147
      %v149 = vpop.xlane.xlu0 %148
      %v150 = vmul.f32 %v146, %v139
      %v151 = vmul.f32 %v149, %v139
      %v152 = vmul.f32 %v140, %v140
      %v153 = vmul.f32 %v141, %v141
      %v154 = vsub.f32 %v150, %v152
      %v155 = vsub.f32 %v151, %v153
      %v156 = vmax.f32 %v154, 0.0
      %v157 = vmax.f32 %v155, 0.0
      %v158 = vsub.f32 %v131, %v140
      %v159 = vsub.f32 %v132, %v141
      %v160 = vadd.f32 %v156, 1e-05
      %v161 = vadd.f32 %v157, 1e-05
      %v162 = vrsqrt.pop %v160
      %v163 = vrsqrt.pop %v161
      %v164 = vmul.f32 %v158, %v162
      %v165 = vmul.f32 %v159, %v163
      %v166 = vld [vmem:[%s3] sm:$0x1]
      %v168 = vlaneseq
      %v169 = vshrl.u32 %v168, 7
      %v170 = vsub.s32 0, %v169
      %v171 = vrot.slane %v166, %v170
      %v173 = vmul.f32 %v164, %v171
      %v174 = vmul.f32 %v165, %v171
      %v175 = vld [vmem:[%s4] sm:$0x1]
      %v177 = vlaneseq
      %v178 = vshrl.u32 %v177, 7
      %v179 = vsub.s32 0, %v178
      %v180 = vrot.slane %v175, %v179
      %v182 = vadd.f32 %v173, %v180
      %v183 = vadd.f32 %v174, %v180
      %184 = vst.msk [vmem:[#allocation2] sm:$0xff] %vm41, %v182
      %185 = vst.msk [vmem:[#allocation2 + $0x8] sm:$0xff] %vm41, %v183
    $region29: #{lm_layer_pallas.1} parent=1 // pred_fallthru
      _
    %v186 = vld [vmem:[#allocation2] sm:$0xff]
    %v187 = vld [vmem:[#allocation2 + $0x8] sm:$0xff]
    %v188 = vld [vmem:[%s5] sm:$0xff]
    %v189 = vld [vmem:[%s5 + $0x8] sm:$0xff]
    %v190 = vld [vmem:[%s5 + $0x10] sm:$0xff]
    %v191 = vld [vmem:[%s5 + $0x18] sm:$0xff]
    %vm192 = vcmask 261120
    %v194 = vsel %vm192, %v186, 0
    %v197 = vsel %vm192, %v187, 0
    %199 = vmatprep.subr.mxu0 0.0
    %200 = vmatpush1.msra.mxu0 %v188
    %201 = vmatprep.subr.mxu0 0.0
    %202 = vmatpush1.msra.mxu0 %v189
    %203 = vmatprep.subr.mxu0 0.0
    %204 = vmatpush1.msra.mxu0 %v190
    %205 = vmatprep.subr.mxu0 0.0
    %206 = vmatpush1.msra.mxu0 %v191
    %207 = vmatprep.subr.mxu0 0.0
    %208 = vmatpush1.msra.mxu0 0.0
    %209 = vmatprep.subr.mxu0 0.0
    %210 = vmatpush1.msra.mxu0 0.0
    %211 = vmatprep.subr.mxu0 0.0
    %212 = vmatpush1.msra.mxu0 0.0
    %213 = vmatprep.subr.mxu0 0.0
    %214 = vmatpush1.msra.mxu0 0.0
    %215 = vmatprep.subr.mxu0 0.0
    %216 = vmatpush1.msra.mxu0 0.0
    %217 = vmatprep.subr.mxu0 0.0
    %218 = vmatpush1.msra.mxu0 0.0
    %219 = vmatprep.subr.mxu0 0.0
    %220 = vmatpush1.msra.mxu0 0.0
    %221 = vmatprep.subr.mxu0 0.0
    %222 = vmatpush1.msra.mxu0 0.0
    %223 = vmatprep.subr.mxu0 0.0
    %224 = vmatpush1.msra.mxu0 0.0
    %225 = vmatprep.subr.mxu0 0.0
    %226 = vmatpush1.msra.mxu0 0.0
    %227 = vmatprep.subr.mxu0 0.0
    %228 = vmatpush1.msra.mxu0 0.0
    %229 = vmatprep.subr.mxu0 0.0
    %230 = vmatpush1.msra.mxu0 0.0
    %231 = vmatprep.subr.mxu0 0.0
    %232 = vmatpush1.msra.mxu0 0.0
    %233 = vmatprep.subr.mxu0 0.0
    %234 = vmatpush1.msra.mxu0 0.0
    %235 = vmatprep.subr.mxu0 0.0
    %236 = vmatpush1.msra.mxu0 0.0
    %237 = vmatprep.subr.mxu0 0.0
    %238 = vmatpush1.msra.mxu0 0.0
    %239 = vmatprep.subr.mxu0 0.0
    %240 = vmatpush1.msra.mxu0 0.0
    %241 = vmatprep.subr.mxu0 0.0
    %242 = vmatpush1.msra.mxu0 0.0
    %243 = vmatprep.subr.mxu0 0.0
    %244 = vmatpush1.msra.mxu0 0.0
    %245 = vmatprep.subr.mxu0 0.0
    %246 = vmatpush1.msra.mxu0 0.0
    %247 = vmatprep.subr.mxu0 0.0
    %248 = vmatpush1.msra.mxu0 0.0
    %249 = vmatprep.subr.mxu0 0.0
    %250 = vmatpush1.msra.mxu0 0.0
    %251 = vmatprep.subr.mxu0 0.0
    %252 = vmatpush1.msra.mxu0 0.0
    %253 = vmatprep.subr.mxu0 0.0
    %254 = vmatpush1.msra.mxu0 0.0
    %255 = vmatprep.subr.mxu0 0.0
    %256 = vmatpush1.msra.mxu0 0.0
    %257 = vmatprep.subr.mxu0 0.0
    %258 = vmatpush1.msra.mxu0 0.0
    %259 = vmatprep.subr.mxu0 0.0
    %260 = vmatpush1.msra.mxu0 0.0
    %261 = vmatprep.subr.mxu0 0.0
    %262 = vmatpush1.msra.mxu0 0.0
    %263 = vmatprep.mubr.f32.mxu0 0.0
    %264 = vmatmul.mubr.f32.gmra.mrb[0].mxu0 %v194
    %v265 = vpop.f32.mrb[0].mxu0
    %v266 = vadd.f32 0.0, %v265
    %v267 = vpop.f32.mrb[0].mxu0
    %268 = vmatprep.mubr.f32.mxu0 0.0
    %269 = vmatmul.mubr.f32.gmra.mrb[0].mxu0 %v197
    %v270 = vpop.f32.mrb[0].mxu0
    %v271 = vadd.f32 0.0, %v270
    %v272 = vpop.f32.mrb[0].mxu0
    %273 = vdwg.mxu0
    %274 = vst [vmem:[#allocation3] sm:$0xff] %v266
    %275 = vst [vmem:[#allocation3 + $0x8] sm:$0xff] %v271
    // Predicated region
    $region30: #{lm_layer_pallas.1} parent=1 // pred_check
      _
    $region31: #{lm_layer_pallas.1} parent=1 // pred_check_branch
      %277 = sbr.rel (0) target = $region33
    $region32: #{lm_layer_pallas.1} parent=1 // pred_region
      %s279 = ssub.s32 256, 256
      %280 = vsyncadd [#allocation4], %s279
      %s281 = sshll.u32 [#allocation3], 4
      %s282 = int_to_ptr.vmem [resolvable:$true] %s281
      %287 = dma.vmem_to_hbm [thread:$0]  %s282, 256, %s6, [#allocation4], 128, 128, 8
    $region33: #{lm_layer_pallas.1} parent=1 // pred_fallthru
      _
    // Predicated region
    $region34: #{lm_layer_pallas.1} parent=1 // pred_check
      _
    $region35: #{lm_layer_pallas.1} parent=1 // pred_check_branch
      %289 = sbr.rel (0) target = $region37
    $region36: #{lm_layer_pallas.1} parent=1 // pred_region
      %290 = dma.done [#allocation4], 256
    $region37: #{lm_layer_pallas.1} parent=1 // pred_fallthru
      _
    %291 = vsyncpa [#allocation4], 1

</llo_original>
